<compile_context>
chip_gen: v7x
topology: tpu7x:2x2x1
jax: 0.10.0
libtpu: 0.0.40
codegen_flags: <defaults>
</compile_context>

<pallas_src>
import functools

import jax
import jax.numpy as jnp
from jax.experimental import pallas as pl
from jax.experimental.pallas import tpu as pltpu

LANE = 128  # f32 lane width; hidden dims are padded to this


def _round_up(n, m):
    return ((n + m - 1) // m) * m


def _cdiv(a, b):
    return (a + b - 1) // b


# ----------------------------- Pallas kernel -------------------------------
def disaster_risk_kernel(x_ref,
                         w0_ref, b0_ref,
                         w1_ref, b1_ref,
                         w2c_ref, b2c_ref,
                         cw1_ref, cb1_ref,
                         out_ref,
                         *, num_classes, out_w):
    x = x_ref[...]

    # feature_extractor_0: Linear + BN (pre-folded) + ReLU (+ Dropout = id in eval)
    h = jnp.dot(x.astype(w0_ref.dtype), w0_ref[...],
                preferred_element_type=jnp.float32) + b0_ref[...]
    h = jnp.maximum(h, 0.0)

    # feature_extractor_1: Linear + BN (pre-folded) + ReLU (+ Dropout = id in eval)
    h = jnp.dot(h.astype(w1_ref.dtype), w1_ref[...],
                preferred_element_type=jnp.float32) + b1_ref[...]
    h = jnp.maximum(h, 0.0)

    # feature_extractor_2 (64->32) fused with classifier_0 (32->16), then ReLU
    h = jnp.dot(h.astype(w2c_ref.dtype), w2c_ref[...],
                preferred_element_type=jnp.float32) + b2c_ref[...]
    h = jnp.maximum(h, 0.0)

    # classifier_1 (16->num_classes, lane-padded) + Softmax(dim=1)
    logits = jnp.dot(h.astype(cw1_ref.dtype), cw1_ref[...],
                     preferred_element_type=jnp.float32) + cb1_ref[...]

    lane = jax.lax.broadcasted_iota(jnp.int32, logits.shape, 1)
    valid = lane < num_classes
    neg_min = jnp.finfo(jnp.float32).min
    m = jnp.max(jnp.where(valid, logits, neg_min), axis=-1, keepdims=True)
    e = jnp.where(valid, jnp.exp(logits - m), 0.0)
    denom = jnp.sum(e, axis=-1, keepdims=True)
    probs = e * (1.0 / denom)          # exact f32 reciprocal (approx path is bf16-accurate only)

    out_ref[...] = probs[:, :out_w].astype(out_ref.dtype)


# ------------------------------- Wrapper ------------------------------------
@functools.partial(jax.jit, static_argnames=("num_classes", "block_b"))
def disaster_risk_forward(x, fp, *, num_classes, block_b=8192):
    """x: [B, F] float32; fp: folded & lane-padded params (see fold_and_pad_params)."""
    B, F = x.shape
    assert num_classes <= LANE

    out_w = min(LANE, _round_up(num_classes, 8))   # narrow, lane-aligned output slab

    # Tile count: >=2 (and even) only when B exceeds one tile, so v7x's 2 TCs
    # both get work; otherwise one big tile (best for single-TC v5e/v6e).
    n_tiles = _cdiv(B, block_b)
    if n_tiles > 1 and n_tiles % 2:
        n_tiles += 1
    TB = _round_up(_cdiv(B, n_tiles), 8)           # last-tile padding < 8 rows
    B_pad = n_tiles * TB
    if B_pad != B:
        x = jnp.pad(x, ((0, B_pad - B), (0, 0)))

    weight_args = (fp["w0"], fp["b0"],
                   fp["w1"], fp["b1"],
                   fp["w2c"], fp["b2c"],
                   fp["cw1"], fp["cb1"])

    def resident_spec(a):
        # Whole (small) weight/bias array resident in VMEM across all grid steps.
        return pl.BlockSpec(a.shape, lambda i: (0, 0))

    kernel = functools.partial(disaster_risk_kernel,
                               num_classes=num_classes, out_w=out_w)

    flops_per_row = 2 * (F * LANE + 3 * LANE * LANE)
    cost = pl.CostEstimate(
        flops=B_pad * flops_per_row,
        transcendentals=B_pad * LANE,
        bytes_accessed=(B_pad * F * x.dtype.itemsize
                        + B_pad * out_w * 4
                        + sum(int(a.size) * a.dtype.itemsize for a in weight_args)))

    out_padded = pl.pallas_call(
        kernel,
        out_shape=jax.ShapeDtypeStruct((B_pad, out_w), jnp.float32),
        grid=(n_tiles,),
        in_specs=[pl.BlockSpec((TB, F), lambda i: (i, 0))] +
                 [resident_spec(a) for a in weight_args],
        out_specs=pl.BlockSpec((TB, out_w), lambda i: (i, 0)),
        compiler_params=pltpu.CompilerParams(
            dimension_semantics=("parallel",)),
        cost_estimate=cost,
    )(x, *weight_args)

    return out_padded[:B, :num_classes]


# -------------------------- Parameter construction --------------------------
def init_params(input_dim, num_classes, key):
    """Raw, PyTorch-layout-equivalent parameters (weights stored as [in, out])."""
    ks = jax.random.split(key, 16)
    eps = 1e-5

    def lin(kw, kb, fan_in, fan_out):
        bound = 1.0 / jnp.sqrt(fan_in)
        w = jax.random.uniform(kw, (fan_in, fan_out), jnp.float32, -bound, bound)
        b = jax.random.uniform(kb, (1, fan_out), jnp.float32, -bound, bound)
        return w, b

    def bn_fold(kg, kb, km, kv, feat):
        gamma = 1.0 + 0.1 * jax.random.normal(kg, (1, feat), jnp.float32)
        beta = 0.1 * jax.random.normal(kb, (1, feat), jnp.float32)
        running_mean = 0.1 * jax.random.normal(km, (1, feat), jnp.float32)
        running_var = 1.0 + 0.2 * jax.random.uniform(kv, (1, feat), jnp.float32)
        scale = gamma / jnp.sqrt(running_var + eps)
        shift = beta - running_mean * scale
        return scale, shift

    w0, b0 = lin(ks[0], ks[1], input_dim, 64)
    s0, t0 = bn_fold(ks[2], ks[3], ks[4], ks[5], 64)
    w1, b1 = lin(ks[6], ks[7], 64, 64)
    s1, t1 = bn_fold(ks[8], ks[9], ks[10], ks[11], 64)
    w2, b2 = lin(ks[12], ks[13], 64, 32)
    cw0, cb0 = lin(ks[14], ks[15], 32, 16)
    cw1 = (jnp.arange(16 * num_classes, dtype=jnp.float32)
           .reshape(16, num_classes) % 7 - 3.0) * 0.05
    cb1 = jnp.linspace(-0.1, 0.1, num_classes, dtype=jnp.float32).reshape(1, num_classes)

    return dict(w0=w0, b0=b0, s0=s0, t0=t0,
                w1=w1, b1=b1, s1=s1, t1=t1,
                w2=w2, b2=b2,
                cw0=cw0, cb0=cb0, cw1=cw1, cb1=cb1)


def fold_and_pad_params(p, input_dim, compute_dtype=jnp.float32):
    """Fold BN (eval mode) into the Linear weights, fuse the two activation-free
    Linears (feature_extractor_2 + classifier_0), and zero-pad hidden / class
    dims to 128 lanes. Weights are stored in `compute_dtype` (f32 or bf16);
    biases stay f32 (added to the f32 MXU accumulator in-kernel)."""
    H = LANE

    # BN fold: (x@w + b) * s + t == x@(w*s) + (b*s + t)
    w0f = p["w0"] * p["s0"]
    b0f = p["b0"] * p["s0"] + p["t0"]
    w1f = p["w1"] * p["s1"]
    b1f = p["b1"] * p["s1"] + p["t1"]

    # Fuse feature_extractor_2 and classifier_0 (no activation between them).
    w2c = p["w2"] @ p["cw0"]
    b2c = p["b2"] @ p["cw0"] + p["cb0"]

    def pad_mat(w, rows, cols):
        out = jnp.zeros((rows, cols), jnp.float32)
        return out.at[:w.shape[0], :w.shape[1]].set(w).astype(compute_dtype)

    def pad_bias(b, cols):
        out = jnp.zeros((1, cols), jnp.float32)
        return out.at[:, :b.shape[1]].set(b)          # biases stay f32

    return dict(
        w0=pad_mat(w0f, input_dim, H),   b0=pad_bias(b0f, H),
        w1=pad_mat(w1f, H, H),           b1=pad_bias(b1f, H),
        w2c=pad_mat(w2c, H, H),          b2c=pad_bias(b2c, H),
        cw1=pad_mat(p["cw1"], H, H),     cb1=pad_bias(p["cb1"], H),
    )


def reference_forward(x, p):
    h = x @ p["w0"] + p["b0"]
    h = h * p["s0"] + p["t0"]
    h = jnp.maximum(h, 0.0)
    h = h @ p["w1"] + p["b1"]
    h = h * p["s1"] + p["t1"]
    h = jnp.maximum(h, 0.0)
    h = h @ p["w2"] + p["b2"]
    h = jnp.maximum(h @ p["cw0"] + p["cb0"], 0.0)
    logits = h @ p["cw1"] + p["cb1"]
    return jax.nn.softmax(logits, axis=1)


if __name__ == "__main__":
    INPUT_DIM, NUM_CLASSES = 16, 4
    key = jax.random.PRNGKey(0)
    kx, kp, kx2 = jax.random.split(key, 3)
    params = init_params(INPUT_DIM, NUM_CLASSES, kp)

    # --- small batch, f32, single tile -------------------------------------
    B = 8
    x = jax.random.normal(kx, (B, INPUT_DIM), dtype=jnp.float32)
    folded_f32 = fold_and_pad_params(params, INPUT_DIM)
    out = jax.block_until_ready(
        disaster_risk_forward(x, folded_f32, num_classes=NUM_CLASSES))
    ref = reference_forward(x, params)
    assert out.shape == (B, NUM_CLASSES)
    assert jnp.allclose(jnp.sum(out, axis=1), 1.0, atol=1e-4)
    assert jnp.allclose(out, ref, atol=1e-4, rtol=1e-4)

    # --- awkward batch, multi-tile grid (exercises tiling / batch padding) ---
    B2 = 300
    x2 = jax.random.normal(kx2, (B2, INPUT_DIM), dtype=jnp.float32)
    out2 = jax.block_until_ready(
        disaster_risk_forward(x2, folded_f32, num_classes=NUM_CLASSES, block_b=128))
    ref2 = reference_forward(x2, params)
    assert out2.shape == (B2, NUM_CLASSES)
    assert jnp.allclose(jnp.sum(out2, axis=1), 1.0, atol=1e-4)
    assert jnp.allclose(out2, ref2, atol=1e-4, rtol=1e-4)

    # --- bf16 dot inputs (v5e/v6e MXU-bound path); f32 accumulate + softmax ---
    folded_bf16 = fold_and_pad_params(params, INPUT_DIM, compute_dtype=jnp.bfloat16)
    out3 = jax.block_until_ready(
        disaster_risk_forward(x2, folded_bf16, num_classes=NUM_CLASSES, block_b=128))
    assert out3.shape == (B2, NUM_CLASSES)
    assert jnp.allclose(jnp.sum(out3, axis=1), 1.0, atol=1e-3)
    assert jnp.allclose(out3, ref2, atol=5e-2)

    print("KERNEL_OK")
</pallas_src>

<mosaic_0001>
module attributes {stable_mosaic.version = 11 : i64} {
  func.func @disaster_risk_kernel(%arg0: i32, %arg1: memref<8x16xf32, #tpu.memory_space<vmem>>, %arg2: memref<16x128xf32, #tpu.memory_space<vmem>>, %arg3: memref<1x128xf32, #tpu.memory_space<vmem>>, %arg4: memref<128x128xf32, #tpu.memory_space<vmem>>, %arg5: memref<1x128xf32, #tpu.memory_space<vmem>>, %arg6: memref<128x128xf32, #tpu.memory_space<vmem>>, %arg7: memref<1x128xf32, #tpu.memory_space<vmem>>, %arg8: memref<128x128xf32, #tpu.memory_space<vmem>>, %arg9: memref<1x128xf32, #tpu.memory_space<vmem>>, %arg10: memref<8x8xf32, #tpu.memory_space<vmem>>) attributes {dimension_semantics = [#tpu.dimension_semantics<parallel>], iteration_bounds = array<i64: 1>, scalar_prefetch = 0 : i64, scratch_operands = 0 : i64, tpu.core_type = #tpu.core_type<tc>, window_params = [{transform_indices = @transform_0, window_bounds = array<i64: 8, 16>}, {pipeline_mode = #tpu.pipeline_mode<synchronous>, transform_indices = @transform_1, window_bounds = array<i64: 16, 128>}, {pipeline_mode = #tpu.pipeline_mode<synchronous>, transform_indices = @transform_2, window_bounds = array<i64: 1, 128>}, {pipeline_mode = #tpu.pipeline_mode<synchronous>, transform_indices = @transform_3, window_bounds = array<i64: 128, 128>}, {pipeline_mode = #tpu.pipeline_mode<synchronous>, transform_indices = @transform_4, window_bounds = array<i64: 1, 128>}, {pipeline_mode = #tpu.pipeline_mode<synchronous>, transform_indices = @transform_5, window_bounds = array<i64: 128, 128>}, {pipeline_mode = #tpu.pipeline_mode<synchronous>, transform_indices = @transform_6, window_bounds = array<i64: 1, 128>}, {pipeline_mode = #tpu.pipeline_mode<synchronous>, transform_indices = @transform_7, window_bounds = array<i64: 128, 128>}, {pipeline_mode = #tpu.pipeline_mode<synchronous>, transform_indices = @transform_8, window_bounds = array<i64: 1, 128>}, {transform_indices = @transform_9, window_bounds = array<i64: 8, 8>}]} {
    %c0 = arith.constant 0 : index
    %c0_0 = arith.constant 0 : index
    %0 = vector.load %arg1[%c0, %c0_0] : memref<8x16xf32, #tpu.memory_space<vmem>>, vector<8x16xf32>
    %c0_1 = arith.constant 0 : index
    %c0_2 = arith.constant 0 : index
    %1 = vector.load %arg2[%c0_1, %c0_2] : memref<16x128xf32, #tpu.memory_space<vmem>>, vector<16x128xf32>
    %cst = arith.constant dense<0.000000e+00> : vector<8x128xf32>
    %2 = tpu.matmul %0, %1, %cst {dimension_numbers = #tpu.dot_dimension_numbers<[1], [0], [0], [1], [0, 0, 1, 1], [], []>} : vector<8x16xf32>, vector<16x128xf32>, vector<8x128xf32> -> vector<8x128xf32>
    %c0_3 = arith.constant 0 : index
    %c0_4 = arith.constant 0 : index
    %3 = vector.load %arg3[%c0_3, %c0_4] : memref<1x128xf32, #tpu.memory_space<vmem>>, vector<1x128xf32>
    %4 = vector.broadcast %3 : vector<1x128xf32> to vector<8x128xf32>
    %5 = arith.addf %2, %4 : vector<8x128xf32>
    %cst_5 = arith.constant 0.000000e+00 : f32
    %6 = vector.broadcast %cst_5 : f32 to vector<8x128xf32>
    %7 = arith.maximumf %5, %6 : vector<8x128xf32>
    %c0_6 = arith.constant 0 : index
    %c0_7 = arith.constant 0 : index
    %8 = vector.load %arg4[%c0_6, %c0_7] : memref<128x128xf32, #tpu.memory_space<vmem>>, vector<128x128xf32>
    %cst_8 = arith.constant dense<0.000000e+00> : vector<8x128xf32>
    %9 = tpu.matmul %7, %8, %cst_8 {dimension_numbers = #tpu.dot_dimension_numbers<[1], [0], [0], [1], [0, 0, 1, 1], [], []>} : vector<8x128xf32>, vector<128x128xf32>, vector<8x128xf32> -> vector<8x128xf32>
    %c0_9 = arith.constant 0 : index
    %c0_10 = arith.constant 0 : index
    %10 = vector.load %arg5[%c0_9, %c0_10] : memref<1x128xf32, #tpu.memory_space<vmem>>, vector<1x128xf32>
    %11 = vector.broadcast %10 : vector<1x128xf32> to vector<8x128xf32>
    %12 = arith.addf %9, %11 : vector<8x128xf32>
    %cst_11 = arith.constant 0.000000e+00 : f32
    %13 = vector.broadcast %cst_11 : f32 to vector<8x128xf32>
    %14 = arith.maximumf %12, %13 : vector<8x128xf32>
    %c0_12 = arith.constant 0 : index
    %c0_13 = arith.constant 0 : index
    %15 = vector.load %arg6[%c0_12, %c0_13] : memref<128x128xf32, #tpu.memory_space<vmem>>, vector<128x128xf32>
    %cst_14 = arith.constant dense<0.000000e+00> : vector<8x128xf32>
    %16 = tpu.matmul %14, %15, %cst_14 {dimension_numbers = #tpu.dot_dimension_numbers<[1], [0], [0], [1], [0, 0, 1, 1], [], []>} : vector<8x128xf32>, vector<128x128xf32>, vector<8x128xf32> -> vector<8x128xf32>
    %c0_15 = arith.constant 0 : index
    %c0_16 = arith.constant 0 : index
    %17 = vector.load %arg7[%c0_15, %c0_16] : memref<1x128xf32, #tpu.memory_space<vmem>>, vector<1x128xf32>
    %18 = vector.broadcast %17 : vector<1x128xf32> to vector<8x128xf32>
    %19 = arith.addf %16, %18 : vector<8x128xf32>
    %cst_17 = arith.constant 0.000000e+00 : f32
    %20 = vector.broadcast %cst_17 : f32 to vector<8x128xf32>
    %21 = arith.maximumf %19, %20 : vector<8x128xf32>
    %c0_18 = arith.constant 0 : index
    %c0_19 = arith.constant 0 : index
    %22 = vector.load %arg8[%c0_18, %c0_19] : memref<128x128xf32, #tpu.memory_space<vmem>>, vector<128x128xf32>
    %cst_20 = arith.constant dense<0.000000e+00> : vector<8x128xf32>
    %23 = tpu.matmul %21, %22, %cst_20 {dimension_numbers = #tpu.dot_dimension_numbers<[1], [0], [0], [1], [0, 0, 1, 1], [], []>} : vector<8x128xf32>, vector<128x128xf32>, vector<8x128xf32> -> vector<8x128xf32>
    %c0_21 = arith.constant 0 : index
    %c0_22 = arith.constant 0 : index
    %24 = vector.load %arg9[%c0_21, %c0_22] : memref<1x128xf32, #tpu.memory_space<vmem>>, vector<1x128xf32>
    %25 = vector.broadcast %24 : vector<1x128xf32> to vector<8x128xf32>
    %26 = arith.addf %23, %25 : vector<8x128xf32>
    %27 = tpu.iota {dimensions = array<i32: 1>} : vector<8x128xi32>
    %c4_i32 = arith.constant 4 : i32
    %28 = vector.broadcast %c4_i32 : i32 to vector<8x128xi32>
    %29 = arith.cmpi slt, %27, %28 : vector<8x128xi32>
    %cst_23 = arith.constant -3.40282347E+38 : f32
    %30 = vector.broadcast %cst_23 : f32 to vector<8x128xf32>
    %31 = arith.select %29, %26, %30 : vector<8x128xi1>, vector<8x128xf32>
    %cst_24 = arith.constant dense<0xFF800000> : vector<8xf32>
    %32 = vector.multi_reduction <maximumf>, %31, %cst_24 [1] : vector<8x128xf32> to vector<8xf32>
    %33 = vector.shape_cast %32 : vector<8xf32> to vector<8x1xf32>
    %34 = vector.broadcast %33 : vector<8x1xf32> to vector<8x128xf32>
    %35 = arith.subf %26, %34 : vector<8x128xf32>
    %36 = math.exp %35 : vector<8x128xf32>
    %cst_25 = arith.constant 0.000000e+00 : f32
    %37 = vector.broadcast %cst_25 : f32 to vector<8x128xf32>
    %38 = arith.select %29, %36, %37 : vector<8x128xi1>, vector<8x128xf32>
    %cst_26 = arith.constant dense<0.000000e+00> : vector<8xf32>
    %39 = vector.multi_reduction <add>, %38, %cst_26 [1] : vector<8x128xf32> to vector<8xf32>
    %40 = vector.shape_cast %39 : vector<8xf32> to vector<8x1xf32>
    %cst_27 = arith.constant 1.000000e+00 : f32
    %41 = vector.broadcast %cst_27 : f32 to vector<8x1xf32>
    %42 = arith.divf %41, %40 : vector<8x1xf32>
    %43 = vector.broadcast %42 : vector<8x1xf32> to vector<8x128xf32>
    %44 = arith.mulf %38, %43 : vector<8x128xf32>
    %45 = vector.extract_strided_slice %44 {offsets = [0, 0], sizes = [8, 8], strides = [1, 1]} : vector<8x128xf32> to vector<8x8xf32>
    %c0_28 = arith.constant 0 : index
    %c0_29 = arith.constant 0 : index
    %46 = vector.load %arg10[%c0_28, %c0_29] : memref<8x8xf32, #tpu.memory_space<vmem>>, vector<8x8xf32>
    tpu.vector_store %arg10[%c0_28, %c0_29], %45 {strides = array<i32>} : memref<8x8xf32, #tpu.memory_space<vmem>>, vector<8x8xf32>,
    return
  }
  func.func @transform_0(%arg0: i32) -> (i32, i32) {
    %c0_i32 = arith.constant 0 : i32
    %c0_i32_0 = arith.constant 0 : i32
    return %arg0, %c0_i32 : i32, i32
  }
  func.func @transform_1(%arg0: i32) -> (i32, i32) {
    %c0_i32 = arith.constant 0 : i32
    %c0_i32_0 = arith.constant 0 : i32
    %c0_i32_1 = arith.constant 0 : i32
    return %c0_i32, %c0_i32_0 : i32, i32
  }
  func.func @transform_2(%arg0: i32) -> (i32, i32) {
    %c0_i32 = arith.constant 0 : i32
    %c0_i32_0 = arith.constant 0 : i32
    %c0_i32_1 = arith.constant 0 : i32
    return %c0_i32, %c0_i32_0 : i32, i32
  }
  func.func @transform_3(%arg0: i32) -> (i32, i32) {
    %c0_i32 = arith.constant 0 : i32
    %c0_i32_0 = arith.constant 0 : i32
    %c0_i32_1 = arith.constant 0 : i32
    return %c0_i32, %c0_i32_0 : i32, i32
  }
  func.func @transform_4(%arg0: i32) -> (i32, i32) {
    %c0_i32 = arith.constant 0 : i32
    %c0_i32_0 = arith.constant 0 : i32
    %c0_i32_1 = arith.constant 0 : i32
    return %c0_i32, %c0_i32_0 : i32, i32
  }
  func.func @transform_5(%arg0: i32) -> (i32, i32) {
    %c0_i32 = arith.constant 0 : i32
    %c0_i32_0 = arith.constant 0 : i32
    %c0_i32_1 = arith.constant 0 : i32
    return %c0_i32, %c0_i32_0 : i32, i32
  }
  func.func @transform_6(%arg0: i32) -> (i32, i32) {
    %c0_i32 = arith.constant 0 : i32
    %c0_i32_0 = arith.constant 0 : i32
    %c0_i32_1 = arith.constant 0 : i32
    return %c0_i32, %c0_i32_0 : i32, i32
  }
  func.func @transform_7(%arg0: i32) -> (i32, i32) {
    %c0_i32 = arith.constant 0 : i32
    %c0_i32_0 = arith.constant 0 : i32
    %c0_i32_1 = arith.constant 0 : i32
    return %c0_i32, %c0_i32_0 : i32, i32
  }
  func.func @transform_8(%arg0: i32) -> (i32, i32) {
    %c0_i32 = arith.constant 0 : i32
    %c0_i32_0 = arith.constant 0 : i32
    %c0_i32_1 = arith.constant 0 : i32
    return %c0_i32, %c0_i32_0 : i32, i32
  }
  func.func @transform_9(%arg0: i32) -> (i32, i32) {
    %c0_i32 = arith.constant 0 : i32
    %c0_i32_0 = arith.constant 0 : i32
    return %arg0, %c0_i32 : i32, i32
  }
}

</mosaic_0001>

<llo_original>
// kernel: disaster_risk_forward.1
$region0: #{disaster_risk_forward.1}
  #allocation0 [shape = 'u32[]', space=smem, size = 0x4, offset = 0x4, fixed_abs, tag = 'smem constant byte address 0x4 - core index']
  #allocation1 [shape = 'u32[144,128]{1,0:T(1,128)}', space=vmem, size = 0x12000, scoped, tag = 'internal scratch']
  %s0 = inlined_call_operand.hbm [shape: f32[8,16], index: 0, kind: input, shape index: {}]
  %s1 = inlined_call_operand.vmem [shape: f32[16,128], index: 1, kind: input, shape index: {}]
  %s2 = inlined_call_operand.vmem [shape: f32[1,128], index: 2, kind: input, shape index: {}]
  %s3 = inlined_call_operand.hbm [shape: f32[128,128], index: 3, kind: input, shape index: {}]
  %s4 = inlined_call_operand.vmem [shape: f32[1,128], index: 4, kind: input, shape index: {}]
  %s5 = inlined_call_operand.hbm [shape: f32[128,128], index: 5, kind: input, shape index: {}]
  %s6 = inlined_call_operand.vmem [shape: f32[1,128], index: 6, kind: input, shape index: {}]
  %s7 = inlined_call_operand.hbm [shape: f32[128,128], index: 7, kind: input, shape index: {}]
  %s8 = inlined_call_operand.vmem [shape: f32[1,128], index: 8, kind: input, shape index: {}]
  %s9 = inlined_call_operand.vmem [shape: f32[8,8], index: 9, kind: output, shape index: {}]
  %s10 = sld [smem:[#allocation0]]
  $region62: #{disaster_risk_forward.1} parent=0
    _
  %s12 = ssub.s32 1, %s10
  %s13 = scalar_select 0, %s12, %s10
  $region1: #{disaster_risk_forward.1} parent=0
    #allocation2 [shape = 'u8[4096]{0}', space=vmem, size = 0x1000, scoped, tag = 'input window, operand 0, single buffered']
    #allocation3 [shape = 's32[1]{0}', space=sflag, size = 0x4, scoped, tag = 'scoped memory for disaster_risk_forward.1']
    #allocation4 [shape = 'u8[65536]{0}', space=vmem, size = 0x10000, scoped, tag = 'input window, operand 3, single buffered']
    #allocation5 [shape = 's32[1]{0}', space=sflag, size = 0x4, scoped, tag = 'scoped memory for disaster_risk_forward.1']
    #allocation6 [shape = 'u8[65536]{0}', space=vmem, size = 0x10000, scoped, tag = 'input window, operand 5, single buffered']
    #allocation7 [shape = 'u8[65536]{0}', space=vmem, size = 0x10000, scoped, tag = 'input window, operand 7, single buffered']
    #allocation8 [shape = 's32[1]{0}', space=sflag, size = 0x4, scoped, tag = 'scoped memory for disaster_risk_forward.1']
    %14 = vsyncpa [#allocation3], 0
    %15 = vsyncpa [#allocation5], 0
    %16 = vsyncpa [#allocation8], 0
    // Predicated region
    $region2: #{disaster_risk_forward.1} parent=1 // pred_check
      _
    $region3: #{disaster_risk_forward.1} parent=1 // pred_check_branch
      %18 = sbr.rel (0) target = $region5
    $region4: #{disaster_risk_forward.1} parent=1 // pred_region
      %s20 = ssub.s32 128, 128
      %21 = vsyncadd [#allocation3], %s20
      %s23 = sshll.u32 [#allocation2], 4
      %s24 = int_to_ptr.vmem [resolvable:$true] %s23
      %26 = dma.hbm_to_vmem [thread:$0]  %s0, 128, %s24, [#allocation3]
    $region5: #{disaster_risk_forward.1} parent=1 // pred_fallthru
      _
    // Predicated region
    $region6: #{disaster_risk_forward.1} parent=1 // pred_check
      _
    $region7: #{disaster_risk_forward.1} parent=1 // pred_check_branch
      %28 = sbr.rel (0) target = $region9
    $region8: #{disaster_risk_forward.1} parent=1 // pred_region
      _
    $region9: #{disaster_risk_forward.1} parent=1 // pred_fallthru
      _
    // Predicated region
    $region10: #{disaster_risk_forward.1} parent=1 // pred_check
      _
    $region11: #{disaster_risk_forward.1} parent=1 // pred_check_branch
      %30 = sbr.rel (0) target = $region13
    $region12: #{disaster_risk_forward.1} parent=1 // pred_region
      _
    $region13: #{disaster_risk_forward.1} parent=1 // pred_fallthru
      _
    // Predicated region
    $region14: #{disaster_risk_forward.1} parent=1 // pred_check
      _
    $region15: #{disaster_risk_forward.1} parent=1 // pred_check_branch
      %32 = sbr.rel (0) target = $region17
    $region16: #{disaster_risk_forward.1} parent=1 // pred_region
      %s34 = ssub.s32 2048, 2048
      %35 = vsyncadd [#allocation5], %s34
      %s36 = sshll.u32 [#allocation4], 4
      %s37 = int_to_ptr.vmem [resolvable:$true] %s36
      %42 = dma.hbm_to_vmem [thread:$0]  %s3, 2048, %s37, [#allocation5], 128, 128, 8
    $region17: #{disaster_risk_forward.1} parent=1 // pred_fallthru
      _
    // Predicated region
    $region18: #{disaster_risk_forward.1} parent=1 // pred_check
      _
    $region19: #{disaster_risk_forward.1} parent=1 // pred_check_branch
      %44 = sbr.rel (0) target = $region21
    $region20: #{disaster_risk_forward.1} parent=1 // pred_region
      _
    $region21: #{disaster_risk_forward.1} parent=1 // pred_fallthru
      _
    // Predicated region
    $region22: #{disaster_risk_forward.1} parent=1 // pred_check
      _
    $region23: #{disaster_risk_forward.1} parent=1 // pred_check_branch
      %46 = sbr.rel (0) target = $region25
    $region24: #{disaster_risk_forward.1} parent=1 // pred_region
      %s48 = ssub.s32 2048, 2048
      %49 = vsyncadd [#allocation5], %s48
      %s50 = sshll.u32 [#allocation6], 4
      %s51 = int_to_ptr.vmem [resolvable:$true] %s50
      %56 = dma.hbm_to_vmem [thread:$0]  %s5, 2048, %s51, [#allocation5], 128, 128, 8
    $region25: #{disaster_risk_forward.1} parent=1 // pred_fallthru
      _
    // Predicated region
    $region26: #{disaster_risk_forward.1} parent=1 // pred_check
      _
    $region27: #{disaster_risk_forward.1} parent=1 // pred_check_branch
      %58 = sbr.rel (0) target = $region29
    $region28: #{disaster_risk_forward.1} parent=1 // pred_region
      _
    $region29: #{disaster_risk_forward.1} parent=1 // pred_fallthru
      _
    // Predicated region
    $region30: #{disaster_risk_forward.1} parent=1 // pred_check
      _
    $region31: #{disaster_risk_forward.1} parent=1 // pred_check_branch
      %60 = sbr.rel (0) target = $region33
    $region32: #{disaster_risk_forward.1} parent=1 // pred_region
      %s62 = ssub.s32 2048, 2048
      %63 = vsyncadd [#allocation8], %s62
      %s64 = sshll.u32 [#allocation7], 4
      %s65 = int_to_ptr.vmem [resolvable:$true] %s64
      %70 = dma.hbm_to_vmem [thread:$0]  %s7, 2048, %s65, [#allocation8], 128, 128, 8
    $region33: #{disaster_risk_forward.1} parent=1 // pred_fallthru
      _
    // Predicated region
    $region34: #{disaster_risk_forward.1} parent=1 // pred_check
      _
    $region35: #{disaster_risk_forward.1} parent=1 // pred_check_branch
      %72 = sbr.rel (0) target = $region37
    $region36: #{disaster_risk_forward.1} parent=1 // pred_region
      _
    $region37: #{disaster_risk_forward.1} parent=1 // pred_fallthru
      _
    // Predicated region
    $region38: #{disaster_risk_forward.1} parent=1 // pred_check
      _
    $region39: #{disaster_risk_forward.1} parent=1 // pred_check_branch
      %74 = sbr.rel (0) target = $region41
    $region40: #{disaster_risk_forward.1} parent=1 // pred_region
      %75 = dma.done [#allocation3], 128
    $region41: #{disaster_risk_forward.1} parent=1 // pred_fallthru
      _
    // Predicated region
    $region42: #{disaster_risk_forward.1} parent=1 // pred_check
      _
    $region43: #{disaster_risk_forward.1} parent=1 // pred_check_branch
      %77 = sbr.rel (0) target = $region45
    $region44: #{disaster_risk_forward.1} parent=1 // pred_region
      %78 = dma.done [#allocation5], 2048
    $region45: #{disaster_risk_forward.1} parent=1 // pred_fallthru
      _
    // Predicated region
    $region46: #{disaster_risk_forward.1} parent=1 // pred_check
      _
    $region47: #{disaster_risk_forward.1} parent=1 // pred_check_branch
      %80 = sbr.rel (0) target = $region49
    $region48: #{disaster_risk_forward.1} parent=1 // pred_region
      %81 = dma.done [#allocation5], 2048
    $region49: #{disaster_risk_forward.1} parent=1 // pred_fallthru
      _
    // Predicated region
    $region50: #{disaster_risk_forward.1} parent=1 // pred_check
      _
    $region51: #{disaster_risk_forward.1} parent=1 // pred_check_branch
      %83 = sbr.rel (0) target = $region53
    $region52: #{disaster_risk_forward.1} parent=1 // pred_region
      %84 = dma.done [#allocation8], 2048
    $region53: #{disaster_risk_forward.1} parent=1 // pred_fallthru
      _
    %v85 = vld [vmem:[#allocation2] sm:$0xff]
    %v86 = vld [vmem:[%s1] sm:$0xff]
    %v87 = vld [vmem:[%s1 + $0x8] sm:$0xff]
    %v88 = vld [vmem:[%s2] sm:$0x1]
    %v90 = vlaneseq
    %v91 = vshrl.u32 %v90, 7
    %v92 = vsub.s32 0, %v91
    %v93 = vrot.slane %v88, %v92
    %vm95 = vcmask 130048
    %v97 = vsel %vm95, %v85, 0
    %99 = vmatprep.subr.mxu0 0.0
    %100 = vmatpush1.msra.mxu0 %v86
    %101 = vmatprep.subr.mxu0 0.0
    %102 = vmatpush1.msra.mxu0 %v87
    %103 = vmatprep.subr.mxu0 0.0
    %104 = vmatpush1.msra.mxu0 0.0
    %105 = vmatprep.subr.mxu0 0.0
    %106 = vmatpush1.msra.mxu0 0.0
    %107 = vmatprep.subr.mxu0 0.0
    %108 = vmatpush1.msra.mxu0 0.0
    %109 = vmatprep.subr.mxu0 0.0
    %110 = vmatpush1.msra.mxu0 0.0
    %111 = vmatprep.subr.mxu0 0.0
    %112 = vmatpush1.msra.mxu0 0.0
    %113 = vmatprep.subr.mxu0 0.0
    %114 = vmatpush1.msra.mxu0 0.0
    %115 = vmatprep.subr.mxu0 0.0
    %116 = vmatpush1.msra.mxu0 0.0
    %117 = vmatprep.subr.mxu0 0.0
    %118 = vmatpush1.msra.mxu0 0.0
    %119 = vmatprep.subr.mxu0 0.0
    %120 = vmatpush1.msra.mxu0 0.0
    %121 = vmatprep.subr.mxu0 0.0
    %122 = vmatpush1.msra.mxu0 0.0
    %123 = vmatprep.subr.mxu0 0.0
    %124 = vmatpush1.msra.mxu0 0.0
    %125 = vmatprep.subr.mxu0 0.0
    %126 = vmatpush1.msra.mxu0 0.0
    %127 = vmatprep.subr.mxu0 0.0
    %128 = vmatpush1.msra.mxu0 0.0
    %129 = vmatprep.subr.mxu0 0.0
    %130 = vmatpush1.msra.mxu0 0.0
    %131 = vmatprep.subr.mxu0 0.0
    %132 = vmatpush1.msra.mxu0 0.0
    %133 = vmatprep.subr.mxu0 0.0
    %134 = vmatpush1.msra.mxu0 0.0
    %135 = vmatprep.subr.mxu0 0.0
    %136 = vmatpush1.msra.mxu0 0.0
    %137 = vmatprep.subr.mxu0 0.0
    %138 = vmatpush1.msra.mxu0 0.0
    %139 = vmatprep.subr.mxu0 0.0
    %140 = vmatpush1.msra.mxu0 0.0
    %141 = vmatprep.subr.mxu0 0.0
    %142 = vmatpush1.msra.mxu0 0.0
    %143 = vmatprep.subr.mxu0 0.0
    %144 = vmatpush1.msra.mxu0 0.0
    %145 = vmatprep.subr.mxu0 0.0
    %146 = vmatpush1.msra.mxu0 0.0
    %147 = vmatprep.subr.mxu0 0.0
    %148 = vmatpush1.msra.mxu0 0.0
    %149 = vmatprep.subr.mxu0 0.0
    %150 = vmatpush1.msra.mxu0 0.0
    %151 = vmatprep.subr.mxu0 0.0
    %152 = vmatpush1.msra.mxu0 0.0
    %153 = vmatprep.subr.mxu0 0.0
    %154 = vmatpush1.msra.mxu0 0.0
    %155 = vmatprep.subr.mxu0 0.0
    %156 = vmatpush1.msra.mxu0 0.0
    %157 = vmatprep.subr.mxu0 0.0
    %158 = vmatpush1.msra.mxu0 0.0
    %159 = vmatprep.subr.mxu0 0.0
    %160 = vmatpush1.msra.mxu0 0.0
    %161 = vmatprep.subr.mxu0 0.0
    %162 = vmatpush1.msra.mxu0 0.0
    %163 = vmatprep.mubr.f32.mxu0 0.0
    %164 = vmatmul.mubr.f32.gmra.mrb[0].mxu0 %v97
    %v165 = vpop.f32.mrb[0].mxu0
    %v166 = vadd.f32 %v93, %v165
    %v167 = vpop.f32.mrb[0].mxu0
    %168 = vdwg.mxu0
    %v169 = vmax.f32 %v166, 0.0
    %v170 = vld [vmem:[#allocation4] sm:$0xff]
    %v171 = vld [vmem:[#allocation4 + $0x8] sm:$0xff]
    %v172 = vld [vmem:[#allocation4 + $0x10] sm:$0xff]
    %v173 = vld [vmem:[#allocation4 + $0x18] sm:$0xff]
    %v174 = vld [vmem:[#allocation4 + $0x20] sm:$0xff]
    %v175 = vld [vmem:[#allocation4 + $0x28] sm:$0xff]
    %v176 = vld [vmem:[#allocation4 + $0x30] sm:$0xff]
    %v177 = vld [vmem:[#allocation4 + $0x38] sm:$0xff]
    %v178 = vld [vmem:[#allocation4 + $0x40] sm:$0xff]
    %v179 = vld [vmem:[#allocation4 + $0x48] sm:$0xff]
    %v180 = vld [vmem:[#allocation4 + $0x50] sm:$0xff]
    %v181 = vld [vmem:[#allocation4 + $0x58] sm:$0xff]
    %v182 = vld [vmem:[#allocation4 + $0x60] sm:$0xff]
    %v183 = vld [vmem:[#allocation4 + $0x68] sm:$0xff]
    %v184 = vld [vmem:[#allocation4 + $0x70] sm:$0xff]
    %v185 = vld [vmem:[#allocation4 + $0x78] sm:$0xff]
    %v186 = vld [vmem:[%s4] sm:$0x1]
    %v188 = vlaneseq
    %v189 = vshrl.u32 %v188, 7
    %v190 = vsub.s32 0, %v189
    %v191 = vrot.slane %v186, %v190
    %193 = vmatprep.subr.mxu0 0.0
    %194 = vmatpush1.msra.mxu0 %v170
    %195 = vmatprep.subr.mxu0 0.0
    %196 = vmatpush1.msra.mxu0 %v171
    %197 = vmatprep.subr.mxu0 0.0
    %198 = vmatpush1.msra.mxu0 %v172
    %199 = vmatprep.subr.mxu0 0.0
    %200 = vmatpush1.msra.mxu0 %v173
    %201 = vmatprep.subr.mxu0 0.0
    %202 = vmatpush1.msra.mxu0 %v174
    %203 = vmatprep.subr.mxu0 0.0
    %204 = vmatpush1.msra.mxu0 %v175
    %205 = vmatprep.subr.mxu0 0.0
    %206 = vmatpush1.msra.mxu0 %v176
    %207 = vmatprep.subr.mxu0 0.0
    %208 = vmatpush1.msra.mxu0 %v177
    %209 = vmatprep.subr.mxu0 0.0
    %210 = vmatpush1.msra.mxu0 %v178
    %211 = vmatprep.subr.mxu0 0.0
    %212 = vmatpush1.msra.mxu0 %v179
    %213 = vmatprep.subr.mxu0 0.0
    %214 = vmatpush1.msra.mxu0 %v180
    %215 = vmatprep.subr.mxu0 0.0
    %216 = vmatpush1.msra.mxu0 %v181
    %217 = vmatprep.subr.mxu0 0.0
    %218 = vmatpush1.msra.mxu0 %v182
    %219 = vmatprep.subr.mxu0 0.0
    %220 = vmatpush1.msra.mxu0 %v183
    %221 = vmatprep.subr.mxu0 0.0
    %222 = vmatpush1.msra.mxu0 %v184
    %223 = vmatprep.subr.mxu0 0.0
    %224 = vmatpush1.msra.mxu0 %v185
    %225 = vmatprep.subr.mxu0 0.0
    %226 = vmatpush1.msra.mxu0 0.0
    %227 = vmatprep.subr.mxu0 0.0
    %228 = vmatpush1.msra.mxu0 0.0
    %229 = vmatprep.subr.mxu0 0.0
    %230 = vmatpush1.msra.mxu0 0.0
    %231 = vmatprep.subr.mxu0 0.0
    %232 = vmatpush1.msra.mxu0 0.0
    %233 = vmatprep.subr.mxu0 0.0
    %234 = vmatpush1.msra.mxu0 0.0
    %235 = vmatprep.subr.mxu0 0.0
    %236 = vmatpush1.msra.mxu0 0.0
    %237 = vmatprep.subr.mxu0 0.0
    %238 = vmatpush1.msra.mxu0 0.0
    %239 = vmatprep.subr.mxu0 0.0
    %240 = vmatpush1.msra.mxu0 0.0
    %241 = vmatprep.subr.mxu0 0.0
    %242 = vmatpush1.msra.mxu0 0.0
    %243 = vmatprep.subr.mxu0 0.0
    %244 = vmatpush1.msra.mxu0 0.0
    %245 = vmatprep.subr.mxu0 0.0
    %246 = vmatpush1.msra.mxu0 0.0
    %247 = vmatprep.subr.mxu0 0.0
    %248 = vmatpush1.msra.mxu0 0.0
    %249 = vmatprep.subr.mxu0 0.0
    %250 = vmatpush1.msra.mxu0 0.0
    %251 = vmatprep.subr.mxu0 0.0
    %252 = vmatpush1.msra.mxu0 0.0
    %253 = vmatprep.subr.mxu0 0.0
    %254 = vmatpush1.msra.mxu0 0.0
    %255 = vmatprep.subr.mxu0 0.0
    %256 = vmatpush1.msra.mxu0 0.0
    %257 = vmatprep.mubr.f32.mxu0 0.0
    %258 = vmatmul.mubr.f32.gmra.mrb[0].mxu0 %v169
    %v259 = vpop.f32.mrb[0].mxu0
    %v260 = vadd.f32 %v191, %v259
    %v261 = vpop.f32.mrb[0].mxu0
    %262 = vdwg.mxu0
    %v263 = vmax.f32 %v260, 0.0
    %v264 = vld [vmem:[#allocation6] sm:$0xff]
    %v265 = vld [vmem:[#allocation6 + $0x8] sm:$0xff]
    %v266 = vld [vmem:[#allocation6 + $0x10] sm:$0xff]
    %v267 = vld [vmem:[#allocation6 + $0x18] sm:$0xff]
    %v268 = vld [vmem:[#allocation6 + $0x20] sm:$0xff]
    %v269 = vld [vmem:[#allocation6 + $0x28] sm:$0xff]
    %v270 = vld [vmem:[#allocation6 + $0x30] sm:$0xff]
    %v271 = vld [vmem:[#allocation6 + $0x38] sm:$0xff]
    %v272 = vld [vmem:[#allocation6 + $0x40] sm:$0xff]
    %v273 = vld [vmem:[#allocation6 + $0x48] sm:$0xff]
    %v274 = vld [vmem:[#allocation6 + $0x50] sm:$0xff]
    %v275 = vld [vmem:[#allocation6 + $0x58] sm:$0xff]
    %v276 = vld [vmem:[#allocation6 + $0x60] sm:$0xff]
    %v277 = vld [vmem:[#allocation6 + $0x68] sm:$0xff]
    %v278 = vld [vmem:[#allocation6 + $0x70] sm:$0xff]
    %v279 = vld [vmem:[#allocation6 + $0x78] sm:$0xff]
    %v280 = vld [vmem:[%s6] sm:$0x1]
    %v282 = vlaneseq
    %v283 = vshrl.u32 %v282, 7
    %v284 = vsub.s32 0, %v283
    %v285 = vrot.slane %v280, %v284
    %287 = vmatprep.subr.mxu0 0.0
    %288 = vmatpush1.msra.mxu0 %v264
    %289 = vmatprep.subr.mxu0 0.0
    %290 = vmatpush1.msra.mxu0 %v265
    %291 = vmatprep.subr.mxu0 0.0
    %292 = vmatpush1.msra.mxu0 %v266
    %293 = vmatprep.subr.mxu0 0.0
    %294 = vmatpush1.msra.mxu0 %v267
    %295 = vmatprep.subr.mxu0 0.0
    %296 = vmatpush1.msra.mxu0 %v268
    %297 = vmatprep.subr.mxu0 0.0
    %298 = vmatpush1.msra.mxu0 %v269
    %299 = vmatprep.subr.mxu0 0.0
    %300 = vmatpush1.msra.mxu0 %v270
    %301 = vmatprep.subr.mxu0 0.0
    %302 = vmatpush1.msra.mxu0 %v271
    %303 = vmatprep.subr.mxu0 0.0
    %304 = vmatpush1.msra.mxu0 %v272
    %305 = vmatprep.subr.mxu0 0.0
    %306 = vmatpush1.msra.mxu0 %v273
    %307 = vmatprep.subr.mxu0 0.0
    %308 = vmatpush1.msra.mxu0 %v274
    %309 = vmatprep.subr.mxu0 0.0
    %310 = vmatpush1.msra.mxu0 %v275
    %311 = vmatprep.subr.mxu0 0.0
    %312 = vmatpush1.msra.mxu0 %v276
    %313 = vmatprep.subr.mxu0 0.0
    %314 = vmatpush1.msra.mxu0 %v277
    %315 = vmatprep.subr.mxu0 0.0
    %316 = vmatpush1.msra.mxu0 %v278
    %317 = vmatprep.subr.mxu0 0.0
    %318 = vmatpush1.msra.mxu0 %v279
    %319 = vmatprep.subr.mxu0 0.0
    %320 = vmatpush1.msra.mxu0 0.0
    %321 = vmatprep.subr.mxu0 0.0
    %322 = vmatpush1.msra.mxu0 0.0
    %323 = vmatprep.subr.mxu0 0.0
    %324 = vmatpush1.msra.mxu0 0.0
    %325 = vmatprep.subr.mxu0 0.0
    %326 = vmatpush1.msra.mxu0 0.0
    %327 = vmatprep.subr.mxu0 0.0
    %328 = vmatpush1.msra.mxu0 0.0
    %329 = vmatprep.subr.mxu0 0.0
    %330 = vmatpush1.msra.mxu0 0.0
    %331 = vmatprep.subr.mxu0 0.0
    %332 = vmatpush1.msra.mxu0 0.0
    %333 = vmatprep.subr.mxu0 0.0
    %334 = vmatpush1.msra.mxu0 0.0
    %335 = vmatprep.subr.mxu0 0.0
    %336 = vmatpush1.msra.mxu0 0.0
    %337 = vmatprep.subr.mxu0 0.0
    %338 = vmatpush1.msra.mxu0 0.0
    %339 = vmatprep.subr.mxu0 0.0
    %340 = vmatpush1.msra.mxu0 0.0
    %341 = vmatprep.subr.mxu0 0.0
    %342 = vmatpush1.msra.mxu0 0.0
    %343 = vmatprep.subr.mxu0 0.0
    %344 = vmatpush1.msra.mxu0 0.0
    %345 = vmatprep.subr.mxu0 0.0
    %346 = vmatpush1.msra.mxu0 0.0
    %347 = vmatprep.subr.mxu0 0.0
    %348 = vmatpush1.msra.mxu0 0.0
    %349 = vmatprep.subr.mxu0 0.0
    %350 = vmatpush1.msra.mxu0 0.0
    %351 = vmatprep.mubr.f32.mxu0 0.0
    %352 = vmatmul.mubr.f32.gmra.mrb[0].mxu0 %v263
    %v353 = vpop.f32.mrb[0].mxu0
    %v354 = vadd.f32 %v285, %v353
    %v355 = vpop.f32.mrb[0].mxu0
    %356 = vdwg.mxu0
    %v357 = vmax.f32 %v354, 0.0
    %v358 = vld [vmem:[#allocation7] sm:$0xff]
    %v359 = vld [vmem:[#allocation7 + $0x8] sm:$0xff]
    %v360 = vld [vmem:[#allocation7 + $0x10] sm:$0xff]
    %v361 = vld [vmem:[#allocation7 + $0x18] sm:$0xff]
    %v362 = vld [vmem:[#allocation7 + $0x20] sm:$0xff]
    %v363 = vld [vmem:[#allocation7 + $0x28] sm:$0xff]
    %v364 = vld [vmem:[#allocation7 + $0x30] sm:$0xff]
    %v365 = vld [vmem:[#allocation7 + $0x38] sm:$0xff]
    %v366 = vld [vmem:[#allocation7 + $0x40] sm:$0xff]
    %v367 = vld [vmem:[#allocation7 + $0x48] sm:$0xff]
    %v368 = vld [vmem:[#allocation7 + $0x50] sm:$0xff]
    %v369 = vld [vmem:[#allocation7 + $0x58] sm:$0xff]
    %v370 = vld [vmem:[#allocation7 + $0x60] sm:$0xff]
    %v371 = vld [vmem:[#allocation7 + $0x68] sm:$0xff]
    %v372 = vld [vmem:[#allocation7 + $0x70] sm:$0xff]
    %v373 = vld [vmem:[#allocation7 + $0x78] sm:$0xff]
    %v374 = vld [vmem:[%s8] sm:$0x1]
    %v376 = vlaneseq
    %v377 = vshrl.u32 %v376, 7
    %v378 = vsub.s32 0, %v377
    %v379 = vrot.slane %v374, %v378
    %381 = vmatprep.subr.mxu0 0.0
    %382 = vmatpush1.msra.mxu0 %v358
    %383 = vmatprep.subr.mxu0 0.0
    %384 = vmatpush1.msra.mxu0 %v359
    %385 = vmatprep.subr.mxu0 0.0
    %386 = vmatpush1.msra.mxu0 %v360
    %387 = vmatprep.subr.mxu0 0.0
    %388 = vmatpush1.msra.mxu0 %v361
    %389 = vmatprep.subr.mxu0 0.0
    %390 = vmatpush1.msra.mxu0 %v362
    %391 = vmatprep.subr.mxu0 0.0
    %392 = vmatpush1.msra.mxu0 %v363
    %393 = vmatprep.subr.mxu0 0.0
    %394 = vmatpush1.msra.mxu0 %v364
    %395 = vmatprep.subr.mxu0 0.0
    %396 = vmatpush1.msra.mxu0 %v365
    %397 = vmatprep.subr.mxu0 0.0
    %398 = vmatpush1.msra.mxu0 %v366
    %399 = vmatprep.subr.mxu0 0.0
    %400 = vmatpush1.msra.mxu0 %v367
    %401 = vmatprep.subr.mxu0 0.0
    %402 = vmatpush1.msra.mxu0 %v368
    %403 = vmatprep.subr.mxu0 0.0
    %404 = vmatpush1.msra.mxu0 %v369
    %405 = vmatprep.subr.mxu0 0.0
    %406 = vmatpush1.msra.mxu0 %v370
    %407 = vmatprep.subr.mxu0 0.0
    %408 = vmatpush1.msra.mxu0 %v371
    %409 = vmatprep.subr.mxu0 0.0
    %410 = vmatpush1.msra.mxu0 %v372
    %411 = vmatprep.subr.mxu0 0.0
    %412 = vmatpush1.msra.mxu0 %v373
    %413 = vmatprep.subr.mxu0 0.0
    %414 = vmatpush1.msra.mxu0 0.0
    %415 = vmatprep.subr.mxu0 0.0
    %416 = vmatpush1.msra.mxu0 0.0
    %417 = vmatprep.subr.mxu0 0.0
    %418 = vmatpush1.msra.mxu0 0.0
    %419 = vmatprep.subr.mxu0 0.0
    %420 = vmatpush1.msra.mxu0 0.0
    %421 = vmatprep.subr.mxu0 0.0
    %422 = vmatpush1.msra.mxu0 0.0
    %423 = vmatprep.subr.mxu0 0.0
    %424 = vmatpush1.msra.mxu0 0.0
    %425 = vmatprep.subr.mxu0 0.0
    %426 = vmatpush1.msra.mxu0 0.0
    %427 = vmatprep.subr.mxu0 0.0
    %428 = vmatpush1.msra.mxu0 0.0
    %429 = vmatprep.subr.mxu0 0.0
    %430 = vmatpush1.msra.mxu0 0.0
    %431 = vmatprep.subr.mxu0 0.0
    %432 = vmatpush1.msra.mxu0 0.0
    %433 = vmatprep.subr.mxu0 0.0
    %434 = vmatpush1.msra.mxu0 0.0
    %435 = vmatprep.subr.mxu0 0.0
    %436 = vmatpush1.msra.mxu0 0.0
    %437 = vmatprep.subr.mxu0 0.0
    %438 = vmatpush1.msra.mxu0 0.0
    %439 = vmatprep.subr.mxu0 0.0
    %440 = vmatpush1.msra.mxu0 0.0
    %441 = vmatprep.subr.mxu0 0.0
    %442 = vmatpush1.msra.mxu0 0.0
    %443 = vmatprep.subr.mxu0 0.0
    %444 = vmatpush1.msra.mxu0 0.0
    %445 = vmatprep.mubr.f32.mxu0 0.0
    %446 = vmatmul.mubr.f32.gmra.mrb[0].mxu0 %v357
    %v447 = vpop.f32.mrb[0].mxu0
    %v448 = vadd.f32 %v379, %v447
    %v449 = vpop.f32.mrb[0].mxu0
    %450 = vdwg.mxu0
    %v451 = vlaneseq
    %v452 = vand.u32 %v451, 127
    %vm453 = vcmp.lt.s32.totalorder %v452, 4
    %v454 = vsel %vm453, %v448, -3.4028235e+38
    %455 = vmax.xlane.f32.xlu0 %v454
    %v456 = vpop.xlane.xlu0 %455
    %v457 = vsub.f32 %v448, %v456
    %v458 = vmul.f32 %v457, 1.442695
    %v459 = vpow.pop %v458
    %v460 = vsel %vm453, %v459, 0.0
    %461 = vadd.xlane.f32.xlu0 %v460
    %v462 = vpop.xlane.xlu0 %461
    %v463 = vrcp.pop %v462
    %v464 = vmul.f32 1.0, %v463
    %v465 = vmul.f32 %v460, %v464
    %vm466 = vcmask 64512
    %467 = vst.msk [vmem:[%s9] sm:$0xff] %vm466, %v465
    // Predicated region
    $region54: #{disaster_risk_forward.1} parent=1 // pred_check
      _
    $region55: #{disaster_risk_forward.1} parent=1 // pred_check_branch
      %469 = sbr.rel (0) target = $region57
    $region56: #{disaster_risk_forward.1} parent=1 // pred_region
      _
    $region57: #{disaster_risk_forward.1} parent=1 // pred_fallthru
      _
    // Predicated region
    $region58: #{disaster_risk_forward.1} parent=1 // pred_check
      _
    $region59: #{disaster_risk_forward.1} parent=1 // pred_check_branch
      %471 = sbr.rel (0) target = $region61
    $region60: #{disaster_risk_forward.1} parent=1 // pred_region
      _
    $region61: #{disaster_risk_forward.1} parent=1 // pred_fallthru
      _
    %472 = vsyncpa [#allocation3], 1
    %473 = vsyncpa [#allocation5], 1
    %474 = vsyncpa [#allocation8], 1

</llo_original>
